<compile_context>
chip_gen: v6e
topology: v6e:2x2x1
jax: 0.10.0
libtpu: 0.0.40
codegen_flags: <defaults>
</compile_context>

<pallas_src>
import jax
import jax.numpy as jnp
from jax import lax
from jax.experimental import pallas as pl
from jax.experimental.pallas import tpu as pltpu


def _round_up(x, m):
    return ((x + m - 1) // m) * m


def _row_tile_candidates(n, max_tile=512):
    """Tiles over the patch (row) axis: full dim, or 8-aligned divisors, descending."""
    if n <= max_tile:
        yield n
    start = min(max_tile, (n // 8) * 8)
    for t in range(start, 7, -8):
        if n % t == 0:
            yield t
    if n > max_tile:
        yield n           # last resort: one block over the whole axis


def _e_tile_candidates(e_pad, max_tile=2048):
    """Tiles over the padded embed dim (always a multiple of 128), descending."""
    for cand in range(min(e_pad, max_tile), 127, -128):
        if e_pad % cand == 0:
            yield cand


def _pick_tiles(n, e_pad, c, p, x_item, w_item, out_item, budget=12 << 20):
    """Largest (TN, TE) whose estimated VMEM footprint fits the budget."""
    fallback = None
    for tn in _row_tile_candidates(n):
        for te in _e_tile_candidates(e_pad):
            vmem = (2 * c * tn * p * x_item      # x block, double-buffered
                    + 2 * c * p * te * w_item    # w block, double-buffered
                    + 2 * tn * te * out_item     # out block, double-buffered
                    + tn * te * 4)               # f32 accumulator
            if fallback is None or vmem < fallback[2]:
                fallback = (tn, te, vmem)
            if vmem <= budget:
                return tn, te
    return fallback[0], fallback[1]


def _patch_embed_kernel(x_ref, w_ref, o_ref):
    # x_ref: (C, TN, P) input dtype   w_ref: (C, P, TE) bf16   o_ref: (TN, TE)
    c_in = x_ref.shape[0]
    # Whole (c, p) contraction lives inside one grid step: a short static loop
    # of MXU matmuls (C = in_chans is small for a patch embed), accumulated in
    # f32 vregs / VMEM by the compiler.  Cast x tiles to the compute dtype on
    # the VPU right before the dot.
    acc = jnp.dot(x_ref[0].astype(w_ref.dtype), w_ref[0],
                  preferred_element_type=jnp.float32)
    for c in range(1, c_in):
        acc = acc + jnp.dot(x_ref[c].astype(w_ref.dtype), w_ref[c],
                            preferred_element_type=jnp.float32)
    o_ref[...] = acc.astype(o_ref.dtype)


def patch_embed(x, weight, patch_size, *, compute_dtype=jnp.bfloat16):
    """x: (B, C, L); weight: (E, C, P) (PyTorch Conv1d layout). Returns (B, N, E)."""
    B, C, L = x.shape
    E, Cw, P = weight.shape
    assert Cw == C and P == patch_size and L % patch_size == 0
    N = L // patch_size
    out_dtype = x.dtype

    # Free (no-copy) per-patch view of x; dtype untouched (no extra HBM pass).
    x_r = x.reshape(B, C, N, P)

    # Weight -> (C, P, E_pad): tiny, rearranged / lane-padded once in the wrapper.
    E_pad = _round_up(E, 128)                        # lane-dense output tiles
    w_r = jnp.transpose(weight, (1, 2, 0)).astype(compute_dtype)
    if E_pad != E:
        w_r = jnp.pad(w_r, ((0, 0), (0, 0), (0, E_pad - E)))

    x_item = jnp.dtype(x.dtype).itemsize
    w_item = jnp.dtype(compute_dtype).itemsize
    out_item = jnp.dtype(out_dtype).itemsize
    TN, TE = _pick_tiles(N, E_pad, C, P, x_item, w_item, out_item)
    grid = (B, N // TN, E_pad // TE)                 # E innermost: x not re-fetched

    cost = pl.CostEstimate(
        flops=2 * B * N * E * C * P,
        transcendentals=0,
        bytes_accessed=(B * C * N * P * x_item
                        + C * P * E_pad * w_item
                        + B * N * E_pad * out_item),
    )

    out = pl.pallas_call(
        _patch_embed_kernel,
        out_shape=jax.ShapeDtypeStruct((B, N, E_pad), out_dtype),
        grid=grid,
        in_specs=[
            # One batch element, all channels, TN patches, full P.  Each
            # (c, patch-range) chunk is contiguous in HBM -> clean DMA; the block
            # index is constant across the innermost E axis -> streamed once.
            pl.BlockSpec((None, C, TN, P), lambda b, jn, je: (b, 0, jn, 0)),
            pl.BlockSpec((C, P, TE), lambda b, jn, je: (0, 0, je)),
        ],
        out_specs=pl.BlockSpec((None, TN, TE), lambda b, jn, je: (b, jn, je)),
        compiler_params=pltpu.CompilerParams(
            dimension_semantics=("parallel", "parallel", "parallel"),
        ),
        cost_estimate=cost,
    )(x_r, w_r)

    if E_pad != E:
        out = out[:, :, :E]
    return out                                        # (B, N, E) == 'b c l -> b l c'


if __name__ == "__main__":
    key = jax.random.PRNGKey(0)
    kx, kw = jax.random.split(key)

    B, C, L = 2, 4, 16
    patch_size = 4
    embed_dim = 32

    x = jax.random.normal(kx, (B, C, L), dtype=jnp.float32)
    # Deterministic synthetic Conv1d weight: (embed_dim, in_chans, patch_size), no bias.
    weight = jax.random.normal(kw, (embed_dim, C, patch_size), dtype=jnp.float32) * 0.02

    out = patch_embed(x, weight, patch_size)
    out = jax.block_until_ready(out)

    # Reference: same math on the bf16-rounded operands (kernel multiplies in
    # bf16 with f32 accumulation), via a strided conv exactly like nn.Conv1d.
    x_bf = x.astype(jnp.bfloat16).astype(jnp.float32)
    w_bf = weight.astype(jnp.bfloat16).astype(jnp.float32)
    ref = lax.conv_general_dilated(
        x_bf, w_bf, window_strides=(patch_size,), padding="VALID",
        dimension_numbers=("NCH", "OIH", "NCH"),
        precision=lax.Precision.HIGHEST,
    )                                                 # (B, E, N)
    ref = jnp.transpose(ref, (0, 2, 1))               # (B, N, E)

    assert out.shape == (B, L // patch_size, embed_dim)
    assert jnp.allclose(out, ref, atol=1e-4, rtol=1e-4), \
        float(jnp.max(jnp.abs(out - ref)))

    print("KERNEL_OK")
</pallas_src>

<mosaic_0001>
module attributes {stable_mosaic.version = 11 : i64} {
  func.func @_patch_embed_kernel(%arg0: i32, %arg1: i32, %arg2: i32, %arg3: memref<1x4x4x4xf32, #tpu.memory_space<vmem>>, %arg4: memref<4x4x128xbf16, #tpu.memory_space<vmem>>, %arg5: memref<1x4x128xf32, #tpu.memory_space<vmem>>) attributes {dimension_semantics = [#tpu.dimension_semantics<parallel>, #tpu.dimension_semantics<parallel>, #tpu.dimension_semantics<parallel>], iteration_bounds = array<i64: 2, 1, 1>, scalar_prefetch = 0 : i64, scratch_operands = 0 : i64, tpu.core_type = #tpu.core_type<tc>, window_params = [{transform_indices = @transform_0, window_bounds = array<i64: 1, 4, 4, 4>}, {transform_indices = @transform_1, window_bounds = array<i64: 4, 4, 128>}, {transform_indices = @transform_2, window_bounds = array<i64: 1, 4, 128>}]} {
    %c0 = arith.constant 0 : index
    %c0_0 = arith.constant 0 : index
    %c0_1 = arith.constant 0 : index
    %c0_2 = arith.constant 0 : index
    %0 = vector.load %arg3[%c0, %c0_0, %c0_1, %c0_2] : memref<1x4x4x4xf32, #tpu.memory_space<vmem>>, vector<1x1x4x4xf32>
    %1 = vector.shape_cast %0 : vector<1x1x4x4xf32> to vector<4x4xf32>
    %2 = arith.truncf %1 : vector<4x4xf32> to vector<4x4xbf16>
    %c0_3 = arith.constant 0 : index
    %c0_4 = arith.constant 0 : index
    %c0_5 = arith.constant 0 : index
    %3 = vector.load %arg4[%c0_3, %c0_4, %c0_5] : memref<4x4x128xbf16, #tpu.memory_space<vmem>>, vector<1x4x128xbf16>
    %4 = vector.shape_cast %3 : vector<1x4x128xbf16> to vector<4x128xbf16>
    %cst = arith.constant dense<0.000000e+00> : vector<4x128xf32>
    %5 = tpu.matmul %2, %4, %cst {dimension_numbers = #tpu.dot_dimension_numbers<[1], [0], [0], [1], [0, 0, 1, 1], [], []>} : vector<4x4xbf16>, vector<4x128xbf16>, vector<4x128xf32> -> vector<4x128xf32>
    %c0_6 = arith.constant 0 : index
    %c1 = arith.constant 1 : index
    %c0_7 = arith.constant 0 : index
    %c0_8 = arith.constant 0 : index
    %6 = vector.load %arg3[%c0_6, %c1, %c0_7, %c0_8] : memref<1x4x4x4xf32, #tpu.memory_space<vmem>>, vector<1x1x4x4xf32>
    %7 = vector.shape_cast %6 : vector<1x1x4x4xf32> to vector<4x4xf32>
    %8 = arith.truncf %7 : vector<4x4xf32> to vector<4x4xbf16>
    %c1_9 = arith.constant 1 : index
    %c0_10 = arith.constant 0 : index
    %c0_11 = arith.constant 0 : index
    %9 = vector.load %arg4[%c1_9, %c0_10, %c0_11] : memref<4x4x128xbf16, #tpu.memory_space<vmem>>, vector<1x4x128xbf16>
    %10 = vector.shape_cast %9 : vector<1x4x128xbf16> to vector<4x128xbf16>
    %cst_12 = arith.constant dense<0.000000e+00> : vector<4x128xf32>
    %11 = tpu.matmul %8, %10, %cst_12 {dimension_numbers = #tpu.dot_dimension_numbers<[1], [0], [0], [1], [0, 0, 1, 1], [], []>} : vector<4x4xbf16>, vector<4x128xbf16>, vector<4x128xf32> -> vector<4x128xf32>
    %12 = arith.addf %5, %11 : vector<4x128xf32>
    %c0_13 = arith.constant 0 : index
    %c2 = arith.constant 2 : index
    %c0_14 = arith.constant 0 : index
    %c0_15 = arith.constant 0 : index
    %13 = vector.load %arg3[%c0_13, %c2, %c0_14, %c0_15] : memref<1x4x4x4xf32, #tpu.memory_space<vmem>>, vector<1x1x4x4xf32>
    %14 = vector.shape_cast %13 : vector<1x1x4x4xf32> to vector<4x4xf32>
    %15 = arith.truncf %14 : vector<4x4xf32> to vector<4x4xbf16>
    %c2_16 = arith.constant 2 : index
    %c0_17 = arith.constant 0 : index
    %c0_18 = arith.constant 0 : index
    %16 = vector.load %arg4[%c2_16, %c0_17, %c0_18] : memref<4x4x128xbf16, #tpu.memory_space<vmem>>, vector<1x4x128xbf16>
    %17 = vector.shape_cast %16 : vector<1x4x128xbf16> to vector<4x128xbf16>
    %cst_19 = arith.constant dense<0.000000e+00> : vector<4x128xf32>
    %18 = tpu.matmul %15, %17, %cst_19 {dimension_numbers = #tpu.dot_dimension_numbers<[1], [0], [0], [1], [0, 0, 1, 1], [], []>} : vector<4x4xbf16>, vector<4x128xbf16>, vector<4x128xf32> -> vector<4x128xf32>
    %19 = arith.addf %12, %18 : vector<4x128xf32>
    %c0_20 = arith.constant 0 : index
    %c3 = arith.constant 3 : index
    %c0_21 = arith.constant 0 : index
    %c0_22 = arith.constant 0 : index
    %20 = vector.load %arg3[%c0_20, %c3, %c0_21, %c0_22] : memref<1x4x4x4xf32, #tpu.memory_space<vmem>>, vector<1x1x4x4xf32>
    %21 = vector.shape_cast %20 : vector<1x1x4x4xf32> to vector<4x4xf32>
    %22 = arith.truncf %21 : vector<4x4xf32> to vector<4x4xbf16>
    %c3_23 = arith.constant 3 : index
    %c0_24 = arith.constant 0 : index
    %c0_25 = arith.constant 0 : index
    %23 = vector.load %arg4[%c3_23, %c0_24, %c0_25] : memref<4x4x128xbf16, #tpu.memory_space<vmem>>, vector<1x4x128xbf16>
    %24 = vector.shape_cast %23 : vector<1x4x128xbf16> to vector<4x128xbf16>
    %cst_26 = arith.constant dense<0.000000e+00> : vector<4x128xf32>
    %25 = tpu.matmul %22, %24, %cst_26 {dimension_numbers = #tpu.dot_dimension_numbers<[1], [0], [0], [1], [0, 0, 1, 1], [], []>} : vector<4x4xbf16>, vector<4x128xbf16>, vector<4x128xf32> -> vector<4x128xf32>
    %26 = arith.addf %19, %25 : vector<4x128xf32>
    %c0_27 = arith.constant 0 : index
    %c0_28 = arith.constant 0 : index
    %c0_29 = arith.constant 0 : index
    %27 = vector.load %arg5[%c0_27, %c0_28, %c0_29] : memref<1x4x128xf32, #tpu.memory_space<vmem>>, vector<1x4x128xf32>
    %28 = vector.shape_cast %27 : vector<1x4x128xf32> to vector<4x128xf32>
    %29 = vector.shape_cast %26 : vector<4x128xf32> to vector<1x4x128xf32>
    tpu.vector_store %arg5[%c0_27, %c0_28, %c0_29], %29 {strides = array<i32>} : memref<1x4x128xf32, #tpu.memory_space<vmem>>, vector<1x4x128xf32>,
    return
  }
  func.func @transform_0(%arg0: i32, %arg1: i32, %arg2: i32) -> (i32, i32, i32, i32) {
    %c0_i32 = arith.constant 0 : i32
    %c0_i32_0 = arith.constant 0 : i32
    %c0_i32_1 = arith.constant 0 : i32
    return %arg0, %c0_i32, %arg1, %c0_i32_0 : i32, i32, i32, i32
  }
  func.func @transform_1(%arg0: i32, %arg1: i32, %arg2: i32) -> (i32, i32, i32) {
    %c0_i32 = arith.constant 0 : i32
    %c0_i32_0 = arith.constant 0 : i32
    %c0_i32_1 = arith.constant 0 : i32
    return %c0_i32, %c0_i32_0, %arg2 : i32, i32, i32
  }
  func.func @transform_2(%arg0: i32, %arg1: i32, %arg2: i32) -> (i32, i32, i32) {
    %c0_i32 = arith.constant 0 : i32
    return %arg0, %arg1, %arg2 : i32, i32, i32
  }
}

</mosaic_0001>

<llo_original>
// kernel: tpu_custom_call.1
$region0: #{tpu_custom_call.1}
  #allocation0 [shape = 'u32[]', space=smem, size = 0x4, offset = 0x4, fixed_abs, tag = 'smem constant byte address 0x4 - core index']
  #allocation1 [shape = 'u32[144,128]{1,0:T(1,128)}', space=vmem, size = 0x12000, scoped, tag = 'internal scratch']
  %s0 = inlined_call_operand.hbm [shape: f32[2,4,4,4], index: 0, kind: input, shape index: {}]
  %s1 = inlined_call_operand.hbm [shape: bf16[4,4,128], index: 1, kind: input, shape index: {}]
  %s2 = inlined_call_operand.hbm [shape: f32[2,4,128], index: 2, kind: output, shape index: {}]
  %s3 = sld [smem:[#allocation0]]
  $region49: #{tpu_custom_call.1} parent=0
    _
  %s5 = ssub.s32 1, %s3
  %s6 = scalar_select 0, %s5, %s3
  $region1: #{tpu_custom_call.1} parent=0
    #allocation2 [shape = 'u8[16384]{0}', space=vmem, size = 0x4000, scoped, tag = 'input window, operand 0']
    #allocation3 [shape = 's32[2]{0}', space=sflag, size = 0x8, scoped, tag = 'scoped memory for tpu_custom_call.1']
    #allocation4 [shape = 's32[2]{0}', space=sflag, size = 0x8, scoped, tag = 'scoped memory for tpu_custom_call.1']
    #allocation5 [shape = 'u8[4096]{0}', space=vmem, size = 0x1000, scoped, tag = 'input window, operand 1, single buffered']
    #allocation6 [shape = 's32[1]{0}', space=sflag, size = 0x4, scoped, tag = 'scoped memory for tpu_custom_call.1']
    #allocation7 [shape = 'u8[4096]{0}', space=vmem, size = 0x1000, scoped, tag = 'output window, operand 0']
    %7 = vsyncpa [#allocation3], 0
    %s8 = scalar_lea.sflag [#allocation3], 1
    %9 = vsyncpa %s8, 0
    %10 = vsyncpa [#allocation6], 0
    %11 = vsyncpa [#allocation4], 0
    %s12 = scalar_lea.sflag [#allocation4], 1
    %13 = vsyncpa %s12, 0
    loop: start=0, step=1, limit=4
    $region2: #{tpu_custom_call.1} parent=1 // loop_pre_header
      _
    $region3: #{tpu_custom_call.1} parent=1 // loop_header
      %s15 = sphi 0, %s19
      %p16 = scmp.ge.s32.totalorder %s15, 4
      %s22 = sphi 0, %s41
      %s23 = sphi 0, %s37
      %s24 = sphi 0, %s33
      %s25 = sphi 0, %s22
      %s26 = sphi 0, %s23
      %s27 = sphi 0, %s24
      %s28 = sphi 0, %s25
      %s29 = sphi 0, %s26
      %s30 = sphi 0, %s27
      %s46 = sphi 0, %s48
      %s49 = sphi 0, %s46
      %s50 = sphi 0, %s49
      %s66 = sphi 0, %s50
      %s72 = sphi 0, %s74
      %s75 = sphi 0, %s72
      %s76 = sphi 0, %s75
      %s92 = sphi 0, %s76
      %s102 = sphi 0, %s104
      %s105 = sphi 0, %s102
      %s106 = sphi 0, %s105
      %s122 = sphi 0, %s106
    $region4: #{tpu_custom_call.1} parent=1 // loop_header_branch
      %18 = sbr.rel (%p16) target = $region8
    $region5: #{tpu_custom_call.1} parent=1 // loop_body
      %s20 = ssub.s32 %s15, 1
      %s21 = ssub.s32 %s15, 2
      %s31 = sadd.s32 1, %s24
      %p32 = scmp.ge.s32.totalorder %s31, 1
      %s33 = scalar_select %p32, 0, %s31
      %s34 = sadd.s32 1, %s23
      %s35 = scalar_select %p32, %s34, %s23
      %p36 = scmp.ge.s32.totalorder %s35, 1
      %s37 = scalar_select %p36, 0, %s35
      %s38 = sadd.s32 1, %s22
      %s39 = scalar_select %p36, %s38, %s22
      %p40 = scmp.ge.s32.totalorder %s39, 2
      %s41 = scalar_select %p40, 0, %s39
      %s42 = ssub.s32 %s22, %s41
      %s43 = ssub.s32 %s23, %s37
      %s44 = sor.u32 %s42, %s43
      %p45 = scmp.eq.s32.totalorder %s44, 0
      %s47 = sadd.s32 %s46, 1
      %s48 = scalar_select %p45, %s46, %s47
      %p51 = pneg %p45
      %p52 = scmp.eq.s32.totalorder %s15, 1
      %p53 = por %p51, %p52
      %p54 = scmp.ne.s32.totalorder %s46, %s49
      %p55 = scmp.eq.s32.totalorder %s15, 0
      %p56 = por %p54, %p55
      %p57 = scmp.ne.s32.totalorder %s46, %s49
      %p58 = scmp.eq.s32.totalorder %s20, 1
      %p59 = por %p57, %p58
      %p60 = scmp.ne.s32.totalorder %s49, %s50
      %p61 = scmp.eq.s32.totalorder %s20, 0
      %p62 = por %p60, %p61
      %p63 = scmp.ne.s32.totalorder %s49, %s50
      %p64 = scmp.eq.s32.totalorder %s21, 1
      %p65 = por %p63, %p64
      %p67 = scmp.ne.s32.totalorder %s50, %s66
      %p68 = scmp.eq.s32.totalorder %s21, 0
      %p69 = por %p67, %p68
      %s70 = ssub.s32 %s24, %s33
      %p71 = scmp.eq.s32.totalorder %s70, 0
      %s73 = sadd.s32 %s72, 1
      %s74 = scalar_select %p71, %s72, %s73
      %p77 = pneg %p71
      %p78 = scmp.eq.s32.totalorder %s15, 1
      %p79 = por %p77, %p78
      %p80 = scmp.ne.s32.totalorder %s72, %s75
      %p81 = scmp.eq.s32.totalorder %s15, 0
      %p82 = por %p80, %p81
      %p83 = scmp.ne.s32.totalorder %s72, %s75
      %p84 = scmp.eq.s32.totalorder %s20, 1
      %p85 = por %p83, %p84
      %p86 = scmp.ne.s32.totalorder %s75, %s76
      %p87 = scmp.eq.s32.totalorder %s20, 0
      %p88 = por %p86, %p87
      %p89 = scmp.ne.s32.totalorder %s75, %s76
      %p90 = scmp.eq.s32.totalorder %s21, 1
      %p91 = por %p89, %p90
      %p93 = scmp.ne.s32.totalorder %s76, %s92
      %p94 = scmp.eq.s32.totalorder %s21, 0
      %p95 = por %p93, %p94
      %s96 = ssub.s32 %s22, %s41
      %s97 = ssub.s32 %s23, %s37
      %s98 = sor.u32 %s96, %s97
      %s99 = ssub.s32 %s24, %s33
      %s100 = sor.u32 %s98, %s99
      %p101 = scmp.eq.s32.totalorder %s100, 0
      %s103 = sadd.s32 %s102, 1
      %s104 = scalar_select %p101, %s102, %s103
      %p107 = pneg %p101
      %p108 = scmp.eq.s32.totalorder %s15, 1
      %p109 = por %p107, %p108
      %p110 = scmp.ne.s32.totalorder %s102, %s105
      %p111 = scmp.eq.s32.totalorder %s15, 0
      %p112 = por %p110, %p111
      %p113 = scmp.ne.s32.totalorder %s102, %s105
      %p114 = scmp.eq.s32.totalorder %s20, 1
      %p115 = por %p113, %p114
      %p116 = scmp.ne.s32.totalorder %s105, %s106
      %p117 = scmp.eq.s32.totalorder %s20, 0
      %p118 = por %p116, %p117
      %p119 = scmp.ne.s32.totalorder %s105, %s106
      %p120 = scmp.eq.s32.totalorder %s21, 1
      %p121 = por %p119, %p120
      %p123 = scmp.ne.s32.totalorder %s106, %s122
      %p124 = scmp.eq.s32.totalorder %s21, 0
      %p125 = por %p123, %p124
      %p126 = scmp.le.s32.totalorder 1, %s15
      %p127 = scmp.lt.s32.totalorder %s15, 3
      %p128 = pnand %p126, %p127
      %p129 = pneg %p128
      // Predicated region
      $region9: #{tpu_custom_call.1} parent=5 // pred_check
        _
      $region10: #{tpu_custom_call.1} parent=5 // pred_check_branch
        %131 = sbr.rel (%p128) target = $region12
      $region11: #{tpu_custom_call.1} parent=5 // pred_region
        %s132 = ssub.s32 %s15, 1
        // Predicated region
        $region13: #{tpu_custom_call.1} parent=11 // pred_check
          %p133 = pneg %p88
        $region14: #{tpu_custom_call.1} parent=11 // pred_check_branch
          %135 = sbr.rel (%p133) target = $region16
        $region15: #{tpu_custom_call.1} parent=11 // pred_region
          %s137 = ssub.s32 128, 128
          %138 = vsyncadd [#allocation6], %s137
          %s139 = smul.addr %s27, 32
          %s140 = scalar_lea.hbm %s1, %s139
          %s141 = sshll.u32 [#allocation5], 4
          %s142 = int_to_ptr.vmem [resolvable:$true] %s141
          %147 = dma.hbm_to_vmem [thread:$0]  %s140, 128, %s142, [#allocation6], 32, 32, 2
        $region16: #{tpu_custom_call.1} parent=11 // pred_fallthru
          _
      $region12: #{tpu_custom_call.1} parent=5 // pred_fallthru
        _
      %p148 = scmp.lt.s32.totalorder %s15, 2
      // Predicated region
      $region17: #{tpu_custom_call.1} parent=5 // pred_check
        %p149 = pneg %p148
      $region18: #{tpu_custom_call.1} parent=5 // pred_check_branch
        %151 = sbr.rel (%p149) target = $region20
      $region19: #{tpu_custom_call.1} parent=5 // pred_region
        // Predicated region
        $region21: #{tpu_custom_call.1} parent=19 // pred_check
          %p152 = pneg %p56
        $region22: #{tpu_custom_call.1} parent=19 // pred_check_branch
          %154 = sbr.rel (%p152) target = $region24
        $region23: #{tpu_custom_call.1} parent=19 // pred_region
          %s155 = sand.u32 %s46, 1
          %s156 = scalar_lea.sflag [#allocation3], %s155
          %s157 = sand.u32 %s46, 1
          %s158 = smul.addr %s157, 16
          %s159 = scalar_lea.vmem [#allocation2], %s158
          %s161 = ssub.s32 256, 256
          %162 = vsyncadd %s156, %s161
          %s163 = smul.addr %s22, 4
          %s164 = sadd.s32 %s23, %s163
          %s165 = smul.addr %s164, 64
          %s166 = scalar_lea.hbm %s0, %s165
          %s167 = sshll.u32 %s159, 4
          %s168 = int_to_ptr.vmem [resolvable:$true] %s167
          %173 = dma.hbm_to_vmem [thread:$0]  %s166, 256, %s168, %s156, 64, 64, 4
        $region24: #{tpu_custom_call.1} parent=19 // pred_fallthru
          _
      $region20: #{tpu_custom_call.1} parent=5 // pred_fallthru
        _
      %p174 = scmp.le.s32.totalorder 1, %s15
      %p175 = scmp.lt.s32.totalorder %s15, 3
      %p176 = pnand %p174, %p175
      %p177 = pneg %p176
      // Predicated region
      $region25: #{tpu_custom_call.1} parent=5 // pred_check
        _
      $region26: #{tpu_custom_call.1} parent=5 // pred_check_branch
        %179 = sbr.rel (%p176) target = $region28
      $region27: #{tpu_custom_call.1} parent=5 // pred_region
        %s180 = ssub.s32 %s15, 1
        %s181 = sand.u32 %s49, 1
        %s182 = scalar_lea.sflag [#allocation3], %s181
        %s183 = sand.u32 %s49, 1
        %s184 = smul.addr %s183, 16
        %s185 = scalar_lea.vmem [#allocation2], %s184
        // Predicated region
        $region29: #{tpu_custom_call.1} parent=27 // pred_check
          %p186 = pneg %p62
        $region30: #{tpu_custom_call.1} parent=27 // pred_check_branch
          %188 = sbr.rel (%p186) target = $region32
        $region31: #{tpu_custom_call.1} parent=27 // pred_region
          %189 = dma.done %s182, 256
        $region32: #{tpu_custom_call.1} parent=27 // pred_fallthru
          _
        // Predicated region
        $region33: #{tpu_custom_call.1} parent=27 // pred_check
          %p190 = pneg %p88
        $region34: #{tpu_custom_call.1} parent=27 // pred_check_branch
          %192 = sbr.rel (%p190) target = $region36
        $region35: #{tpu_custom_call.1} parent=27 // pred_region
          %193 = dma.done [#allocation6], 128
        $region36: #{tpu_custom_call.1} parent=27 // pred_fallthru
          _
        %s194 = sand.u32 %s49, 1
        %s195 = scalar_lea.sflag [#allocation3], %s194
        %s196 = sand.u32 %s49, 1
        %s197 = smul.addr %s196, 16
        %s198 = scalar_lea.vmem [#allocation2], %s197
        %p199 = pneg %p62
        %p200 = pneg %p59
        %p201 = pneg %p88
        %p202 = pneg %p85
        %p203 = pneg %p118
        %p204 = pneg %p115
        %s205 = sand.u32 %s105, 1
        %s206 = scalar_lea.sflag [#allocation4], %s205
        %s207 = sand.u32 %s105, 1
        %s208 = smul.addr %s207, 4
        %s209 = scalar_lea.vmem [#allocation7], %s208
        %v211 = vld [vmem:[%s185] sm:$0xf]
        %v212 = vpack.c.bf16 %v211, %v211
        %v213 = vld [vmem:[#allocation5] sm:$0x3]
        %s214 = scalar_lea.vmem %s185, 4 [#allocation2]
        %v215 = vld [vmem:[%s214] sm:$0xf]
        %v216 = vpack.c.bf16 %v215, %v215
        %s217 = scalar_lea.vmem [#allocation5], 2
        %v218 = vld [vmem:[%s217] sm:$0x3]
        %vm219 = vcmask 31744
        %v221 = vsel %vm219, %v216, 0
        %vm223 = vcmask 1041408
        %v225 = vsel %vm223, %v218, 0
        %227 = vmatprep.subr.bf16.mxu0 0
        %228 = vmatpush1.bf16.msra.mxu0 0
        %229 = vmatprep.subr.bf16.mxu0 0
        %230 = vmatpush1.bf16.msra.mxu0 0
        %231 = vmatprep.subr.bf16.mxu0 0
        %232 = vmatpush1.bf16.msra.mxu0 0
        %233 = vmatprep.subr.bf16.mxu0 0
        %234 = vmatpush1.bf16.msra.mxu0 0
        %235 = vmatprep.subr.bf16.mxu0 0
        %236 = vmatpush1.bf16.msra.mxu0 0
        %237 = vmatprep.subr.bf16.mxu0 0
        %238 = vmatpush1.bf16.msra.mxu0 0
        %239 = vmatprep.subr.bf16.mxu0 0
        %240 = vmatpush1.bf16.msra.mxu0 0
        %241 = vmatprep.subr.bf16.mxu0 0
        %242 = vmatpush1.bf16.msra.mxu0 %v225
        %243 = vmatprep.subr.bf16.mxu0 0
        %244 = vmatpush2.bf16.msra.mxu0 0
        %245 = vmatprep.subr.bf16.mxu0 0
        %246 = vmatpush2.bf16.msra.mxu0 0
        %247 = vmatprep.subr.bf16.mxu0 0
        %248 = vmatpush2.bf16.msra.mxu0 0
        %249 = vmatprep.subr.bf16.mxu0 0
        %250 = vmatpush2.bf16.msra.mxu0 0
        %251 = vmatprep.subr.bf16.mxu0 0
        %252 = vmatpush2.bf16.msra.mxu0 0
        %253 = vmatprep.subr.bf16.mxu0 0
        %254 = vmatpush2.bf16.msra.mxu0 0
        %255 = vmatprep.subr.bf16.mxu0 0
        %256 = vmatpush2.bf16.msra.mxu0 0
        %257 = vmatprep.subr.bf16.mxu0 0
        %258 = vmatpush2.bf16.msra.mxu0 0
        %259 = vmatprep.mubr.bf16.mxu0 0
        %260 = vmatmul.mubr.bf16.gmra.mxu0 %v221
        %v261 = vpop.f32.mrf.mxu0
        %v262 = vadd.f32 0.0, %v261
        %v263 = vpop.f32.mrf.mxu0
        %v264 = vpop.f32.mrf.mxu0
        %v265 = vpop.f32.mrf.mxu0
        %266 = vdwg.mxu0
        %v268 = vsel %vm219, %v212, 0
        %v271 = vsel %vm223, %v213, 0
        %273 = vmatprep.subr.bf16.mxu0 0
        %274 = vmatpush1.bf16.msra.mxu0 0
        %275 = vmatprep.subr.bf16.mxu0 0
        %276 = vmatpush1.bf16.msra.mxu0 0
        %277 = vmatprep.subr.bf16.mxu0 0
        %278 = vmatpush1.bf16.msra.mxu0 0
        %279 = vmatprep.subr.bf16.mxu0 0
        %280 = vmatpush1.bf16.msra.mxu0 0
        %281 = vmatprep.subr.bf16.mxu0 0
        %282 = vmatpush1.bf16.msra.mxu0 0
        %283 = vmatprep.subr.bf16.mxu0 0
        %284 = vmatpush1.bf16.msra.mxu0 0
        %285 = vmatprep.subr.bf16.mxu0 0
        %286 = vmatpush1.bf16.msra.mxu0 0
        %287 = vmatprep.subr.bf16.mxu0 0
        %288 = vmatpush1.bf16.msra.mxu0 %v271
        %289 = vmatprep.subr.bf16.mxu0 0
        %290 = vmatpush2.bf16.msra.mxu0 0
        %291 = vmatprep.subr.bf16.mxu0 0
        %292 = vmatpush2.bf16.msra.mxu0 0
        %293 = vmatprep.subr.bf16.mxu0 0
        %294 = vmatpush2.bf16.msra.mxu0 0
        %295 = vmatprep.subr.bf16.mxu0 0
        %296 = vmatpush2.bf16.msra.mxu0 0
        %297 = vmatprep.subr.bf16.mxu0 0
        %298 = vmatpush2.bf16.msra.mxu0 0
        %299 = vmatprep.subr.bf16.mxu0 0
        %300 = vmatpush2.bf16.msra.mxu0 0
        %301 = vmatprep.subr.bf16.mxu0 0
        %302 = vmatpush2.bf16.msra.mxu0 0
        %303 = vmatprep.subr.bf16.mxu0 0
        %304 = vmatpush2.bf16.msra.mxu0 0
        %305 = vmatprep.mubr.bf16.mxu0 0
        %306 = vmatmul.mubr.bf16.gmra.mxu0 %v268
        %v307 = vpop.f32.mrf.mxu0
        %v308 = vadd.f32 %v262, %v307
        %v309 = vpop.f32.mrf.mxu0
        %v310 = vpop.f32.mrf.mxu0
        %v311 = vpop.f32.mrf.mxu0
        %312 = vdwg.mxu0
        %s313 = scalar_lea.vmem %s185, 8 [#allocation2]
        %v314 = vld [vmem:[%s313] sm:$0xf]
        %v315 = vpack.c.bf16 %v314, %v314
        %s316 = scalar_lea.vmem [#allocation5], 4
        %v317 = vld [vmem:[%s316] sm:$0x3]
        %v319 = vsel %vm219, %v315, 0
        %v322 = vsel %vm223, %v317, 0
        %324 = vmatprep.subr.bf16.mxu0 0
        %325 = vmatpush1.bf16.msra.mxu0 0
        %326 = vmatprep.subr.bf16.mxu0 0
        %327 = vmatpush1.bf16.msra.mxu0 0
        %328 = vmatprep.subr.bf16.mxu0 0
        %329 = vmatpush1.bf16.msra.mxu0 0
        %330 = vmatprep.subr.bf16.mxu0 0
        %331 = vmatpush1.bf16.msra.mxu0 0
        %332 = vmatprep.subr.bf16.mxu0 0
        %333 = vmatpush1.bf16.msra.mxu0 0
        %334 = vmatprep.subr.bf16.mxu0 0
        %335 = vmatpush1.bf16.msra.mxu0 0
        %336 = vmatprep.subr.bf16.mxu0 0
        %337 = vmatpush1.bf16.msra.mxu0 0
        %338 = vmatprep.subr.bf16.mxu0 0
        %339 = vmatpush1.bf16.msra.mxu0 %v322
        %340 = vmatprep.subr.bf16.mxu0 0
        %341 = vmatpush2.bf16.msra.mxu0 0
        %342 = vmatprep.subr.bf16.mxu0 0
        %343 = vmatpush2.bf16.msra.mxu0 0
        %344 = vmatprep.subr.bf16.mxu0 0
        %345 = vmatpush2.bf16.msra.mxu0 0
        %346 = vmatprep.subr.bf16.mxu0 0
        %347 = vmatpush2.bf16.msra.mxu0 0
        %348 = vmatprep.subr.bf16.mxu0 0
        %349 = vmatpush2.bf16.msra.mxu0 0
        %350 = vmatprep.subr.bf16.mxu0 0
        %351 = vmatpush2.bf16.msra.mxu0 0
        %352 = vmatprep.subr.bf16.mxu0 0
        %353 = vmatpush2.bf16.msra.mxu0 0
        %354 = vmatprep.subr.bf16.mxu0 0
        %355 = vmatpush2.bf16.msra.mxu0 0
        %356 = vmatprep.mubr.bf16.mxu0 0
        %357 = vmatmul.mubr.bf16.gmra.mxu0 %v319
        %v358 = vpop.f32.mrf.mxu0
        %v359 = vadd.f32 0.0, %v358
        %v360 = vpop.f32.mrf.mxu0
        %v361 = vpop.f32.mrf.mxu0
        %v362 = vpop.f32.mrf.mxu0
        %363 = vdwg.mxu0
        %v364 = vadd.f32 %v308, %v359
        %s365 = scalar_lea.vmem %s185, 12 [#allocation2]
        %v366 = vld [vmem:[%s365] sm:$0xf]
        %v367 = vpack.c.bf16 %v366, %v366
        %s368 = scalar_lea.vmem [#allocation5], 6
        %v369 = vld [vmem:[%s368] sm:$0x3]
        %v371 = vsel %vm219, %v367, 0
        %v374 = vsel %vm223, %v369, 0
        %376 = vmatprep.subr.bf16.mxu0 0
        %377 = vmatpush1.bf16.msra.mxu0 0
        %378 = vmatprep.subr.bf16.mxu0 0
        %379 = vmatpush1.bf16.msra.mxu0 0
        %380 = vmatprep.subr.bf16.mxu0 0
        %381 = vmatpush1.bf16.msra.mxu0 0
        %382 = vmatprep.subr.bf16.mxu0 0
        %383 = vmatpush1.bf16.msra.mxu0 0
        %384 = vmatprep.subr.bf16.mxu0 0
        %385 = vmatpush1.bf16.msra.mxu0 0
        %386 = vmatprep.subr.bf16.mxu0 0
        %387 = vmatpush1.bf16.msra.mxu0 0
        %388 = vmatprep.subr.bf16.mxu0 0
        %389 = vmatpush1.bf16.msra.mxu0 0
        %390 = vmatprep.subr.bf16.mxu0 0
        %391 = vmatpush1.bf16.msra.mxu0 %v374
        %392 = vmatprep.subr.bf16.mxu0 0
        %393 = vmatpush2.bf16.msra.mxu0 0
        %394 = vmatprep.subr.bf16.mxu0 0
        %395 = vmatpush2.bf16.msra.mxu0 0
        %396 = vmatprep.subr.bf16.mxu0 0
        %397 = vmatpush2.bf16.msra.mxu0 0
        %398 = vmatprep.subr.bf16.mxu0 0
        %399 = vmatpush2.bf16.msra.mxu0 0
        %400 = vmatprep.subr.bf16.mxu0 0
        %401 = vmatpush2.bf16.msra.mxu0 0
        %402 = vmatprep.subr.bf16.mxu0 0
        %403 = vmatpush2.bf16.msra.mxu0 0
        %404 = vmatprep.subr.bf16.mxu0 0
        %405 = vmatpush2.bf16.msra.mxu0 0
        %406 = vmatprep.subr.bf16.mxu0 0
        %407 = vmatpush2.bf16.msra.mxu0 0
        %408 = vmatprep.mubr.bf16.mxu0 0
        %409 = vmatmul.mubr.bf16.gmra.mxu0 %v371
        %v410 = vpop.f32.mrf.mxu0
        %v411 = vadd.f32 0.0, %v410
        %v412 = vpop.f32.mrf.mxu0
        %v413 = vpop.f32.mrf.mxu0
        %v414 = vpop.f32.mrf.mxu0
        %415 = vdwg.mxu0
        %v416 = vadd.f32 %v364, %v411
        %417 = vst [vmem:[%s209] sm:$0xf] %v416
        %s418 = sand.u32 %s105, 1
        %s419 = scalar_lea.sflag [#allocation4], %s418
        %s420 = sand.u32 %s105, 1
        %s421 = smul.addr %s420, 4
        %s422 = scalar_lea.vmem [#allocation7], %s421
        // Predicated region
        $region37: #{tpu_custom_call.1} parent=27 // pred_check
          %p423 = pneg %p115
        $region38: #{tpu_custom_call.1} parent=27 // pred_check_branch
          %425 = sbr.rel (%p423) target = $region40
        $region39: #{tpu_custom_call.1} parent=27 // pred_region
          %s427 = ssub.s32 64, 64
          %428 = vsyncadd %s419, %s427
          %s429 = sadd.s32 %s27, %s26
          %s430 = sadd.s32 %s429, %s25
          %s431 = smul.addr %s430, 64
          %s432 = scalar_lea.hbm %s2, %s431
          %s434 = sshll.u32 %s422, 4
          %s435 = int_to_ptr.vmem [resolvable:$true] %s434
          %437 = dma.vmem_to_hbm [thread:$0]  %s435, 64, %s432, %s419
        $region40: #{tpu_custom_call.1} parent=27 // pred_fallthru
          _
      $region28: #{tpu_custom_call.1} parent=5 // pred_fallthru
        _
      %p438 = scmp.le.s32.totalorder 2, %s15
      // Predicated region
      $region41: #{tpu_custom_call.1} parent=5 // pred_check
        %p439 = pneg %p438
      $region42: #{tpu_custom_call.1} parent=5 // pred_check_branch
        %441 = sbr.rel (%p439) target = $region44
      $region43: #{tpu_custom_call.1} parent=5 // pred_region
        %s442 = ssub.s32 %s15, 2
        // Predicated region
        $region45: #{tpu_custom_call.1} parent=43 // pred_check
          %p443 = pneg %p121
        $region46: #{tpu_custom_call.1} parent=43 // pred_check_branch
          %445 = sbr.rel (%p443) target = $region48
        $region47: #{tpu_custom_call.1} parent=43 // pred_region
          %s446 = sand.u32 %s106, 1
          %s447 = scalar_lea.sflag [#allocation4], %s446
          %s448 = sand.u32 %s106, 1
          %s449 = smul.addr %s448, 4
          %s450 = scalar_lea.vmem [#allocation7], %s449
          %451 = dma.done %s447, 64
        $region48: #{tpu_custom_call.1} parent=43 // pred_fallthru
          _
      $region44: #{tpu_custom_call.1} parent=5 // pred_fallthru
        _
    $region6: #{tpu_custom_call.1} parent=1 // loop_footer
      %s19 = sadd.s32 1, %s15
    $region7: #{tpu_custom_call.1} parent=1 // loop_footer_branch
      %14 = sbr.rel target = $region3
    $region8: #{tpu_custom_call.1} parent=1 // loop_exit
      _
    %452 = vsyncpa [#allocation3], 1
    %s453 = scalar_lea.sflag [#allocation3], 1
    %454 = vsyncpa %s453, 1
    %455 = vsyncpa [#allocation6], 1
    %456 = vsyncpa [#allocation4], 1
    %s457 = scalar_lea.sflag [#allocation4], 1
    %458 = vsyncpa %s457, 1

</llo_original>
